<compile_context>
chip_gen: v6e
topology: v6e:2x2x1
jax: 0.10.0
libtpu: 0.0.40
codegen_flags: <defaults>
</compile_context>

<pallas_src>
import functools

import jax
import jax.numpy as jnp
from jax import lax
from jax.experimental import pallas as pl
from jax.experimental.pallas import tpu as pltpu

_EPS = 1e-4
_EPS2 = _EPS * _EPS

_LANES = 128
_GROUP = 64                     # rows per output partial (8 f32 accumulator vregs)
_TARGET_BLOCK_BYTES = 4 << 20   # ~4 MiB input block per grid step (tunable)


def _make_cpf_kernel(blk_rows, group, rows_valid, needs_mask):
    """Build a kernel reducing one (blk_rows, 128) block to a (group, 128) partial."""
    n_groups = blk_rows // group

    def kernel(x_ref, out_ref):
        xv = x_ref[...].astype(jnp.float32)
        v = jnp.sqrt(xv * xv + jnp.float32(_EPS2))
        if needs_mask:
            # Last block grid-overruns past rows_valid: zero the garbage rows.
            row0 = pl.program_id(0) * blk_rows
            rid = row0 + lax.broadcasted_iota(jnp.int32, (blk_rows, _LANES), 0)
            v = jnp.where(rid < rows_valid, v, jnp.float32(0.0))
        # Regroup sublanes in chunks of `group` (layout no-op: splits the
        # second-to-last dim) and add slab-wise: group/8 independent f32
        # accumulator vregs -> wide ILP, pure VPU work, no XLU, unmasked
        # lane+sublane-dense store.  The single cross-lane reduce happens
        # once in the wrapper over the tiny partials array.
        out_ref[...] = jnp.sum(v.reshape(n_groups, group, _LANES), axis=0)

    return kernel


@functools.partial(jax.jit, static_argnames=("mean",))
def cpf_loss(x, mean=True):
    """Pallas implementation of CPF.forward(x, mean)."""
    n = x.size
    eps2 = jnp.float32(_EPS2)
    x_flat = jnp.reshape(x, (-1,))          # contiguous flatten: free bitcast

    itemsize = jnp.dtype(x.dtype).itemsize
    sublane = max(8, 32 // itemsize)        # 8 (f32) / 16 (bf16,f16) / 32 (i8,fp8)

    pad = (-n) % _LANES
    rows_total = (n + pad) // _LANES

    if rows_total < sublane:
        # Too small to form even one minimal tile: plain-jnp (a few vregs).
        xf = x_flat.astype(jnp.float32)
        total = jnp.sum(jnp.sqrt(xf * xf + eps2))
    else:
        if pad:
            # Only when n % 128 != 0 (rare for image-shaped tensors): one bulk
            # zero-pad copy; each pad element contributes exactly sqrt(eps^2)
            # and is subtracted back out below.
            x_flat = jnp.pad(x_flat, (0, pad))
        x2d = x_flat.reshape(rows_total, _LANES)   # free bitcast when pad == 0

        # ---- static (trace-time) tiling decisions ----
        group = _GROUP if rows_total >= _GROUP else sublane
        groups_total = rows_total // group                       # >= 1
        target_groups = max(1, _TARGET_BLOCK_BYTES // (_LANES * itemsize * group))
        if groups_total >= 2:
            # Guarantee >= 2 grid steps so the "parallel" axis can feed both
            # v7x TensorCores; cap each block near _TARGET_BLOCK_BYTES.
            groups_per_blk = min(target_groups, groups_total // 2)
        else:
            groups_per_blk = 1
        blk_rows = groups_per_blk * group                        # <= rows_total
        n_blocks = pl.cdiv(rows_total, blk_rows)
        needs_mask = (rows_total % blk_rows) != 0   # last block grid-overruns

        in_block_bytes = blk_rows * _LANES * itemsize
        out_block_bytes = group * _LANES * 4
        # Double-buffered input + output blocks, plus generous margin for
        # compiler-internal scratch; stays well under every generation's cap.
        vmem_limit = 2 * (in_block_bytes + out_block_bytes) + (4 << 20)

        partials = pl.pallas_call(
            _make_cpf_kernel(blk_rows, group, rows_total, needs_mask),
            out_shape=jax.ShapeDtypeStruct((n_blocks * group, _LANES),
                                           jnp.float32),
            grid=(n_blocks,),
            in_specs=[pl.BlockSpec((blk_rows, _LANES), lambda i: (i, 0))],
            out_specs=pl.BlockSpec((group, _LANES), lambda i: (i, 0)),
            compiler_params=pltpu.CompilerParams(
                dimension_semantics=("parallel",),
                vmem_limit_bytes=vmem_limit,
            ),
            cost_estimate=pl.CostEstimate(
                flops=3 * rows_total * _LANES,
                transcendentals=rows_total * _LANES,
                bytes_accessed=rows_total * _LANES * itemsize
                + n_blocks * out_block_bytes,
            ),
        )(x2d)
        total = jnp.sum(partials, dtype=jnp.float32)

        if pad:
            # Exact correction for the zero padding: sqrt(0 + eps^2) each.
            total = total - jnp.float32(pad) * jnp.sqrt(eps2)

    if mean:
        # Note: float32(n) is inexact for n > 2^24 (matches f32 torch semantics).
        return total / jnp.float32(n)
    return total


if __name__ == "__main__":
    def ref_loss(x, mean):
        v = jnp.sqrt(x.astype(jnp.float32) ** 2 + jnp.float32(_EPS2))
        return jnp.mean(v) if mean else jnp.sum(v)

    # Case 1: small, lane-aligned image-shaped input (module's typical use).
    x1 = jax.random.normal(jax.random.PRNGKey(0), (2, 4, 16, 16), dtype=jnp.float32)
    # Case 2: odd element count -> exercises pad + in-kernel mask path.
    x2 = jax.random.normal(jax.random.PRNGKey(1), (3, 5, 7, 11), dtype=jnp.float32)
    # Case 3: larger slab -> exercises the 64-row partial / multi-block path.
    x3 = jax.random.normal(jax.random.PRNGKey(2), (4, 8, 64, 96), dtype=jnp.float32)

    for x in (x1, x2, x3):
        loss_mean = cpf_loss(x, mean=True)
        loss_sum = cpf_loss(x, mean=False)
        jax.block_until_ready((loss_mean, loss_sum))

        rm, rs = ref_loss(x, True), ref_loss(x, False)
        assert jnp.allclose(loss_mean, rm, rtol=1e-3, atol=1e-5), (loss_mean, rm)
        assert jnp.allclose(loss_sum, rs, rtol=1e-3, atol=1e-3), (loss_sum, rs)

    print("KERNEL_OK")
</pallas_src>

<mosaic_0001>
module attributes {stable_mosaic.version = 11 : i64} {
  func.func @kernel(%arg0: i32, %arg1: memref<8x128xf32, #tpu.memory_space<vmem>>, %arg2: memref<8x128xf32, #tpu.memory_space<vmem>>) attributes {dimension_semantics = [#tpu.dimension_semantics<parallel>], iteration_bounds = array<i64: 2>, scalar_prefetch = 0 : i64, scratch_operands = 0 : i64, tpu.core_type = #tpu.core_type<tc>, window_params = [{transform_indices = @transform_0, window_bounds = array<i64: 8, 128>}, {transform_indices = @transform_1, window_bounds = array<i64: 8, 128>}]} {
    %c0 = arith.constant 0 : index
    %c0_0 = arith.constant 0 : index
    %0 = vector.load %arg1[%c0, %c0_0] : memref<8x128xf32, #tpu.memory_space<vmem>>, vector<8x128xf32>
    %1 = arith.mulf %0, %0 : vector<8x128xf32>
    %cst = arith.constant 9.99999993E-9 : f32
    %2 = vector.broadcast %cst : f32 to vector<8x128xf32>
    %3 = arith.addf %1, %2 : vector<8x128xf32>
    %4 = math.sqrt %3 : vector<8x128xf32>
    %5 = vector.shape_cast %4 : vector<8x128xf32> to vector<1x8x128xf32>
    %cst_1 = arith.constant dense<0.000000e+00> : vector<8x128xf32>
    %6 = vector.multi_reduction <add>, %5, %cst_1 [0] : vector<1x8x128xf32> to vector<8x128xf32>
    %c0_2 = arith.constant 0 : index
    %c0_3 = arith.constant 0 : index
    %7 = vector.load %arg2[%c0_2, %c0_3] : memref<8x128xf32, #tpu.memory_space<vmem>>, vector<8x128xf32>
    tpu.vector_store %arg2[%c0_2, %c0_3], %6 {strides = array<i32>} : memref<8x128xf32, #tpu.memory_space<vmem>>, vector<8x128xf32>,
    return
  }
  func.func @transform_0(%arg0: i32) -> (i32, i32) {
    %c0_i32 = arith.constant 0 : i32
    %c0_i32_0 = arith.constant 0 : i32
    return %arg0, %c0_i32 : i32, i32
  }
  func.func @transform_1(%arg0: i32) -> (i32, i32) {
    %c0_i32 = arith.constant 0 : i32
    %c0_i32_0 = arith.constant 0 : i32
    return %arg0, %c0_i32 : i32, i32
  }
}

</mosaic_0001>

<llo_original>
// kernel: cpf_loss.1
$region0: #{cpf_loss.1}
  #allocation0 [shape = 'u32[]', space=smem, size = 0x4, offset = 0x4, fixed_abs, tag = 'smem constant byte address 0x4 - core index']
  #allocation1 [shape = 'u32[144,128]{1,0:T(1,128)}', space=vmem, size = 0x12000, scoped, tag = 'internal scratch']
  %s0 = inlined_call_operand.vmem [shape: f32[16,128], index: 0, kind: input, shape index: {}]
  %s1 = inlined_call_operand.vmem [shape: f32[16,128], index: 1, kind: output, shape index: {}]
  %s2 = sld [smem:[#allocation0]]
  $region37: #{cpf_loss.1} parent=0
    _
  %s4 = ssub.s32 1, %s2
  %s5 = scalar_select 0, %s4, %s2
  loop: start=0, step=1, limit=4
  $region2: #{cpf_loss.1} parent=0 // loop_pre_header
    _
  $region3: #{cpf_loss.1} parent=0 // loop_header
    %s7 = sphi 0, %s11
    %p8 = scmp.ge.s32.totalorder %s7, 4
    %s17 = sphi 0, %s19
    %s20 = sphi 0, %s17
    %s21 = sphi 0, %s20
    %s37 = sphi 0, %s21
    %s43 = sphi 0, %s45
    %s46 = sphi 0, %s43
    %s47 = sphi 0, %s46
    %s63 = sphi 0, %s47
  $region4: #{cpf_loss.1} parent=0 // loop_header_branch
    %10 = sbr.rel (%p8) target = $region8
  $region5: #{cpf_loss.1} parent=0 // loop_body
    %s12 = ssub.s32 %s7, 1
    %s13 = ssub.s32 %s7, 2
    %s14 = sadd.s32 %s7, 1
    %s15 = ssub.s32 %s7, %s14
    %p16 = scmp.eq.s32.totalorder %s15, 0
    %s18 = sadd.s32 %s17, 1
    %s19 = scalar_select %p16, %s17, %s18
    %p22 = pneg %p16
    %p23 = scmp.eq.s32.totalorder %s7, 1
    %p24 = por %p22, %p23
    %p25 = scmp.ne.s32.totalorder %s17, %s20
    %p26 = scmp.eq.s32.totalorder %s7, 0
    %p27 = por %p25, %p26
    %p28 = scmp.ne.s32.totalorder %s17, %s20
    %p29 = scmp.eq.s32.totalorder %s12, 1
    %p30 = por %p28, %p29
    %p31 = scmp.ne.s32.totalorder %s20, %s21
    %p32 = scmp.eq.s32.totalorder %s12, 0
    %p33 = por %p31, %p32
    %p34 = scmp.ne.s32.totalorder %s20, %s21
    %p35 = scmp.eq.s32.totalorder %s13, 1
    %p36 = por %p34, %p35
    %p38 = scmp.ne.s32.totalorder %s21, %s37
    %p39 = scmp.eq.s32.totalorder %s13, 0
    %p40 = por %p38, %p39
    %s41 = ssub.s32 %s7, %s14
    %p42 = scmp.eq.s32.totalorder %s41, 0
    %s44 = sadd.s32 %s43, 1
    %s45 = scalar_select %p42, %s43, %s44
    %p48 = pneg %p42
    %p49 = scmp.eq.s32.totalorder %s7, 1
    %p50 = por %p48, %p49
    %p51 = scmp.ne.s32.totalorder %s43, %s46
    %p52 = scmp.eq.s32.totalorder %s7, 0
    %p53 = por %p51, %p52
    %p54 = scmp.ne.s32.totalorder %s43, %s46
    %p55 = scmp.eq.s32.totalorder %s12, 1
    %p56 = por %p54, %p55
    %p57 = scmp.ne.s32.totalorder %s46, %s47
    %p58 = scmp.eq.s32.totalorder %s12, 0
    %p59 = por %p57, %p58
    %p60 = scmp.ne.s32.totalorder %s46, %s47
    %p61 = scmp.eq.s32.totalorder %s13, 1
    %p62 = por %p60, %p61
    %p64 = scmp.ne.s32.totalorder %s47, %s63
    %p65 = scmp.eq.s32.totalorder %s13, 0
    %p66 = por %p64, %p65
    %p67 = scmp.le.s32.totalorder 1, %s7
    %p68 = scmp.lt.s32.totalorder %s7, 3
    %p69 = pnand %p67, %p68
    %p70 = pneg %p69
    // Predicated region
    $region9: #{cpf_loss.1} parent=5 // pred_check
      _
    $region10: #{cpf_loss.1} parent=5 // pred_check_branch
      %72 = sbr.rel (%p69) target = $region12
    $region11: #{cpf_loss.1} parent=5 // pred_region
      %s73 = ssub.s32 %s7, 1
    $region12: #{cpf_loss.1} parent=5 // pred_fallthru
      _
    %p74 = scmp.lt.s32.totalorder %s7, 2
    // Predicated region
    $region13: #{cpf_loss.1} parent=5 // pred_check
      %p75 = pneg %p74
    $region14: #{cpf_loss.1} parent=5 // pred_check_branch
      %77 = sbr.rel (%p75) target = $region16
    $region15: #{cpf_loss.1} parent=5 // pred_region
      // Predicated region
      $region17: #{cpf_loss.1} parent=15 // pred_check
        %p78 = pneg %p27
      $region18: #{cpf_loss.1} parent=15 // pred_check_branch
        %80 = sbr.rel (%p78) target = $region20
      $region19: #{cpf_loss.1} parent=15 // pred_region
        %p81 = scmp.lt.s32.totalorder %s7, 1
        %s82 = scalar_select %p81, %s7, 1
        %s83 = smul.addr %s82, 8
        %s84 = scalar_lea.vmem %s0, %s83
      $region20: #{cpf_loss.1} parent=15 // pred_fallthru
        _
    $region16: #{cpf_loss.1} parent=5 // pred_fallthru
      _
    %p85 = scmp.le.s32.totalorder 1, %s7
    %p86 = scmp.lt.s32.totalorder %s7, 3
    %p87 = pnand %p85, %p86
    %p88 = pneg %p87
    // Predicated region
    $region21: #{cpf_loss.1} parent=5 // pred_check
      _
    $region22: #{cpf_loss.1} parent=5 // pred_check_branch
      %90 = sbr.rel (%p87) target = $region24
    $region23: #{cpf_loss.1} parent=5 // pred_region
      %s91 = ssub.s32 %s7, 1
      %p92 = scmp.lt.s32.totalorder %s12, 1
      %s93 = scalar_select %p92, %s12, 1
      %s94 = smul.addr %s93, 8
      %s95 = scalar_lea.vmem %s0, %s94
      %p96 = pneg %p33
      %p97 = pneg %p30
      %p98 = pneg %p59
      %p99 = pneg %p56
      %p100 = scmp.lt.s32.totalorder %s12, 1
      %s101 = scalar_select %p100, %s12, 1
      %s102 = smul.addr %s101, 8
      %s103 = scalar_lea.vmem %s1, %s102
      %p104 = scmp.lt.s32.totalorder %s12, 1
      %s105 = scalar_select %p104, %s12, 1
      %s106 = smul.addr %s105, 8
      %s107 = scalar_lea.vmem %s0, %s106
      %p108 = scmp.lt.s32.totalorder %s12, 1
      %s109 = scalar_select %p108, %s12, 1
      %s110 = smul.addr %s109, 8
      %s111 = scalar_lea.vmem %s1, %s110
      %v112 = vld [vmem:[%s107] sm:$0xff]
      %v113 = vmul.f32 %v112, %v112
      %v114 = vadd.f32 %v113, 1e-08
      %v115 = vrsqrt.pop %v114
      %v116 = vmul.f32 %v114, %v115
      %vm117 = vcmp.eq.f32.partialorder %v114, inf
      %v118 = vsel %vm117, %v114, %v116
      %vm119 = vcmp.eq.f32.partialorder %v114, 0.0
      %v120 = vand.u32 %v114, 2147483648
      %v121 = vsel %vm119, %v120, %v118
      %v122 = vadd.f32 %v121, 0.0
      %123 = vst [vmem:[%s111] sm:$0xff] %v122
      %p124 = scmp.lt.s32.totalorder %s12, 1
      %s125 = scalar_select %p124, %s12, 1
      %s126 = smul.addr %s125, 8
      %s127 = scalar_lea.vmem %s1, %s126
      // Predicated region
      $region25: #{cpf_loss.1} parent=23 // pred_check
        %p128 = pneg %p56
      $region26: #{cpf_loss.1} parent=23 // pred_check_branch
        %130 = sbr.rel (%p128) target = $region28
      $region27: #{cpf_loss.1} parent=23 // pred_region
        _
      $region28: #{cpf_loss.1} parent=23 // pred_fallthru
        _
    $region24: #{cpf_loss.1} parent=5 // pred_fallthru
      _
    %p131 = scmp.le.s32.totalorder 2, %s7
    // Predicated region
    $region29: #{cpf_loss.1} parent=5 // pred_check
      %p132 = pneg %p131
    $region30: #{cpf_loss.1} parent=5 // pred_check_branch
      %134 = sbr.rel (%p132) target = $region32
    $region31: #{cpf_loss.1} parent=5 // pred_region
      %s135 = ssub.s32 %s7, 2
      // Predicated region
      $region33: #{cpf_loss.1} parent=31 // pred_check
        %p136 = pneg %p62
      $region34: #{cpf_loss.1} parent=31 // pred_check_branch
        %138 = sbr.rel (%p136) target = $region36
      $region35: #{cpf_loss.1} parent=31 // pred_region
        %p139 = scmp.lt.s32.totalorder %s13, 1
        %s140 = scalar_select %p139, %s13, 1
        %s141 = smul.addr %s140, 8
        %s142 = scalar_lea.vmem %s1, %s141
      $region36: #{cpf_loss.1} parent=31 // pred_fallthru
        _
    $region32: #{cpf_loss.1} parent=5 // pred_fallthru
      _
  $region6: #{cpf_loss.1} parent=0 // loop_footer
    %s11 = sadd.s32 1, %s7
  $region7: #{cpf_loss.1} parent=0 // loop_footer_branch
    %6 = sbr.rel target = $region3
  $region8: #{cpf_loss.1} parent=0 // loop_exit
    _

</llo_original>
